<compile_context>
chip_gen: v7x
topology: tpu7x:2x2x1
jax: 0.10.0
libtpu: 0.0.40
codegen_flags: <defaults>
</compile_context>

<pallas_src>
import functools

import jax
import jax.numpy as jnp
from jax.experimental import pallas as pl
from jax.experimental.pallas import tpu as pltpu

BN_EPS = 1e-5
F_PAD = 128      # every hidden width is padded to one lane-dense 128-wide slab
N_LAYERS = 5


def _mlp_kernel(x_ref, w_ref, t_ref, o_ref, *, compute_dtype):
    """Fused 5-layer MLP: 4x (matmul + shift + ReLU) + head (matmul + bias).

    x_ref : (bt, 128)       f32 (cast to compute_dtype in-kernel)
    w_ref : (5, 128, 128)   compute_dtype; BN scale folded in, zero padded
    t_ref : (8, 128)        f32; row k = per-layer shift (BN+bias folded), zero padded
    o_ref : (bt, wm)        f32; only the valid watermark columns are stored
    """
    shifts = t_ref[...]                              # (8, 128) f32, loaded once
    h = x_ref[...].astype(compute_dtype)             # in-kernel cast: no extra HBM pass
    # Hidden layers: matmul (MXU, f32 accumulate) + shift + ReLU (f32 on the VPU).
    for k in range(4):
        z = jnp.dot(h, w_ref[k], preferred_element_type=jnp.float32)
        z = z + shifts[k:k + 1, :]
        h = jnp.maximum(z, 0.0).astype(compute_dtype)    # cast back only for next MXU op
    # Head: Linear(16, wm) (padded to 128), plain bias, no activation.
    out = jnp.dot(h, w_ref[4], preferred_element_type=jnp.float32)
    out = out + shifts[4:5, :]
    # Store only the valid wm columns (narrow output block -> much less HBM writeback).
    o_ref[...] = out[:, :o_ref.shape[1]].astype(o_ref.dtype)


def _fold_bn_scale_shift(bias, gamma, beta, mean, var):
    """Fold Linear bias + eval-mode BatchNorm1d into (scale, shift) vectors."""
    scale = gamma / jnp.sqrt(var + BN_EPS)
    shift = (bias - mean) * scale + beta
    return scale, shift


def _pack_params(params, compute_dtype):
    """Fold BN into weights/shifts and pad everything to 128 lanes.

    Returns:
      w_stack: (5, 128, 128) compute_dtype  (W already transposed to [in,out])
      t_stack: (8, 128) f32                 (rows 0..3 = BN shifts, row 4 = head bias)
    Padding columns/rows are zero, so padded activation lanes stay exactly 0
    through every layer (shift pads are 0 and ReLU(0)=0).
    """
    w_stack = jnp.zeros((N_LAYERS, F_PAD, F_PAD), jnp.float32)
    t_stack = jnp.zeros((8, F_PAD), jnp.float32)
    for k in range(1, 5):
        w = params[f"w{k}"].T                                   # [in, out]
        scale, shift = _fold_bn_scale_shift(
            params[f"b{k}"], params[f"g{k}"], params[f"be{k}"],
            params[f"m{k}"], params[f"v{k}"])
        w = w * scale[None, :]                                  # fold BN scale into W
        fin, fout = w.shape
        w_stack = w_stack.at[k - 1, :fin, :fout].set(w)
        t_stack = t_stack.at[k - 1, :fout].set(shift)
    w5 = params["w5"].T                                         # [16, wm]
    fin, fout = w5.shape
    w_stack = w_stack.at[4, :fin, :fout].set(w5)
    t_stack = t_stack.at[4, :fout].set(params["b5"])
    return w_stack.astype(compute_dtype), t_stack


def _round_up(x, m):
    return m * ((x + m - 1) // m)


def _choose_batch_tiling(B, *, max_tile=1024, min_steps=2):
    """Pick (batch_tile, padded_B).

    - tile is a multiple of 8 sublanes, capped at max_tile,
    - at least `min_steps` grid steps whenever B allows it (v7x has 2 TensorCores
      and the "parallel" grid axis is sharded across them),
    - padding is only up to the chosen tile, never to a blind large multiple.
    """
    b8 = _round_up(max(B, 1), 8)
    if b8 <= 8:
        return 8, 8
    steps = max(min_steps, -(-b8 // max_tile))
    tile = min(max_tile, _round_up(-(-b8 // steps), 8))
    b_pad = _round_up(b8, tile)
    return tile, b_pad


def d_watermark_128_forward(x, params, *, max_batch_tile=1024,
                            compute_dtype=jnp.bfloat16):
    """x: [B, 128] float32 -> [B, watermark_size] float32 (eval-mode forward)."""
    B, F_in = x.shape
    assert F_in == 128, "D_watermark_128 expects 128 input features"
    wm = params["w5"].shape[0]
    assert wm <= F_PAD, "watermark_size must be <= 128 for this kernel"

    w_stack, t_stack = _pack_params(params, compute_dtype)

    tile, b_pad = _choose_batch_tiling(B, max_tile=max_batch_tile)
    if b_pad != B:
        x = jnp.pad(x, ((0, b_pad - B), (0, 0)))
    # x is kept in its HBM dtype (f32); the cast to compute_dtype happens in-kernel.

    grid = (b_pad // tile,)
    w_bytes = w_stack.size * jnp.dtype(compute_dtype).itemsize
    cost = pl.CostEstimate(
        flops=2 * b_pad * N_LAYERS * F_PAD * F_PAD,
        transcendentals=0,
        bytes_accessed=(b_pad * F_PAD * x.dtype.itemsize   # x (f32 in)
                        + w_bytes                          # packed weights
                        + t_stack.size * 4                 # packed shifts
                        + b_pad * wm * 4))                 # narrow f32 output

    kernel = functools.partial(_mlp_kernel, compute_dtype=compute_dtype)

    out = pl.pallas_call(
        kernel,
        out_shape=jax.ShapeDtypeStruct((b_pad, wm), jnp.float32),
        grid_spec=pl.GridSpec(
            grid=grid,
            in_specs=[
                pl.BlockSpec((tile, F_PAD), lambda i: (i, 0)),
                pl.BlockSpec((N_LAYERS, F_PAD, F_PAD), lambda i: (0, 0, 0)),
                pl.BlockSpec((8, F_PAD), lambda i: (0, 0)),
            ],
            out_specs=pl.BlockSpec((tile, wm), lambda i: (i, 0)),
        ),
        compiler_params=pltpu.CompilerParams(
            dimension_semantics=("parallel",)),
        cost_estimate=cost,
    )(x, w_stack, t_stack)

    return out[:B] if b_pad != B else out


def _make_params(key, watermark_size=32):
    """Deterministic synthetic parameters matching the module's __init__ shapes."""
    dims = [(128, 128), (128, 64), (64, 32), (32, 16), (16, watermark_size)]
    params = {}
    for idx, (fin, fout) in enumerate(dims, start=1):
        key, kw, kb, kg, kbe, km, kv = jax.random.split(key, 7)
        bound = 1.0 / jnp.sqrt(fin)
        # PyTorch nn.Linear weight layout: [out, in]
        params[f"w{idx}"] = jax.random.uniform(kw, (fout, fin), jnp.float32, -bound, bound)
        params[f"b{idx}"] = jax.random.uniform(kb, (fout,), jnp.float32, -bound, bound)
        if idx <= 4:  # BatchNorm1d params for the first four blocks
            params[f"g{idx}"] = 1.0 + 0.1 * jax.random.normal(kg, (fout,), jnp.float32)
            params[f"be{idx}"] = 0.1 * jax.random.normal(kbe, (fout,), jnp.float32)
            params[f"m{idx}"] = 0.05 * jax.random.normal(km, (fout,), jnp.float32)
            params[f"v{idx}"] = 1.0 + 0.1 * jax.random.uniform(kv, (fout,), jnp.float32)
    return params


def _reference_forward(x, params):
    """Plain-JAX reference of the same eval-mode forward pass (PyTorch semantics)."""
    h = x
    for idx in range(1, 5):
        z = h @ params[f"w{idx}"].T + params[f"b{idx}"]
        z = (z - params[f"m{idx}"]) / jnp.sqrt(params[f"v{idx}"] + BN_EPS)
        z = z * params[f"g{idx}"] + params[f"be{idx}"]
        h = jnp.maximum(z, 0.0)
    return h @ params["w5"].T + params["b5"]


if __name__ == "__main__":
    key = jax.random.PRNGKey(0)
    k_params, k_x, k_x2 = jax.random.split(key, 3)

    B, watermark_size = 8, 32
    params = _make_params(k_params, watermark_size=watermark_size)
    x = jax.random.normal(k_x, (B, 128), jnp.float32)

    ref = _reference_forward(x, params)

    # f32 compute path: tight numerical check against the reference.
    out_f32 = jax.block_until_ready(
        d_watermark_128_forward(x, params, compute_dtype=jnp.float32))
    assert out_f32.shape == (B, watermark_size)
    assert jnp.allclose(out_f32, ref, atol=1e-4, rtol=1e-4), "f32 mismatch vs reference"

    # bf16 compute path (MXU fast path): loose sanity check
    # (bf16 weight/activation quantization error only).
    out_bf16 = jax.block_until_ready(
        d_watermark_128_forward(x, params, compute_dtype=jnp.bfloat16))
    assert out_bf16.shape == (B, watermark_size)
    assert jnp.allclose(out_bf16, ref, atol=1e-1, rtol=1e-1), "bf16 mismatch vs reference"

    # Multi-tile path (adaptive tiling + batch padding + >=2 grid steps): B = 300.
    x2 = jax.random.normal(k_x2, (300, 128), jnp.float32)
    ref2 = _reference_forward(x2, params)
    out2 = jax.block_until_ready(
        d_watermark_128_forward(x2, params, compute_dtype=jnp.float32))
    assert out2.shape == (300, watermark_size)
    assert jnp.allclose(out2, ref2, atol=1e-4, rtol=1e-4), "multi-tile mismatch vs reference"

    print("KERNEL_OK")
</pallas_src>

<mosaic_0001>
module attributes {stable_mosaic.version = 11 : i64} {
  func.func @_mlp_kernel(%arg0: i32, %arg1: memref<8x128xf32, #tpu.memory_space<vmem>>, %arg2: memref<5x128x128xf32, #tpu.memory_space<vmem>>, %arg3: memref<8x128xf32, #tpu.memory_space<vmem>>, %arg4: memref<8x32xf32, #tpu.memory_space<vmem>>) attributes {dimension_semantics = [#tpu.dimension_semantics<parallel>], iteration_bounds = array<i64: 1>, scalar_prefetch = 0 : i64, scratch_operands = 0 : i64, tpu.core_type = #tpu.core_type<tc>, window_params = [{transform_indices = @transform_0, window_bounds = array<i64: 8, 128>}, {pipeline_mode = #tpu.pipeline_mode<synchronous>, transform_indices = @transform_1, window_bounds = array<i64: 5, 128, 128>}, {pipeline_mode = #tpu.pipeline_mode<synchronous>, transform_indices = @transform_2, window_bounds = array<i64: 8, 128>}, {transform_indices = @transform_3, window_bounds = array<i64: 8, 32>}]} {
    %c0 = arith.constant 0 : index
    %c0_0 = arith.constant 0 : index
    %0 = vector.load %arg3[%c0, %c0_0] : memref<8x128xf32, #tpu.memory_space<vmem>>, vector<8x128xf32>
    %c0_1 = arith.constant 0 : index
    %c0_2 = arith.constant 0 : index
    %1 = vector.load %arg1[%c0_1, %c0_2] : memref<8x128xf32, #tpu.memory_space<vmem>>, vector<8x128xf32>
    %c0_3 = arith.constant 0 : index
    %c0_4 = arith.constant 0 : index
    %c0_5 = arith.constant 0 : index
    %2 = vector.load %arg2[%c0_3, %c0_4, %c0_5] : memref<5x128x128xf32, #tpu.memory_space<vmem>>, vector<1x128x128xf32>
    %3 = vector.shape_cast %2 : vector<1x128x128xf32> to vector<128x128xf32>
    %cst = arith.constant dense<0.000000e+00> : vector<8x128xf32>
    %4 = tpu.matmul %1, %3, %cst {dimension_numbers = #tpu.dot_dimension_numbers<[1], [0], [0], [1], [0, 0, 1, 1], [], []>} : vector<8x128xf32>, vector<128x128xf32>, vector<8x128xf32> -> vector<8x128xf32>
    %5 = vector.extract_strided_slice %0 {offsets = [0, 0], sizes = [1, 128], strides = [1, 1]} : vector<8x128xf32> to vector<1x128xf32>
    %6 = vector.broadcast %5 : vector<1x128xf32> to vector<8x128xf32>
    %7 = arith.addf %4, %6 : vector<8x128xf32>
    %cst_6 = arith.constant 0.000000e+00 : f32
    %8 = vector.broadcast %cst_6 : f32 to vector<8x128xf32>
    %9 = arith.maximumf %7, %8 : vector<8x128xf32>
    %c1 = arith.constant 1 : index
    %c0_7 = arith.constant 0 : index
    %c0_8 = arith.constant 0 : index
    %10 = vector.load %arg2[%c1, %c0_7, %c0_8] : memref<5x128x128xf32, #tpu.memory_space<vmem>>, vector<1x128x128xf32>
    %11 = vector.shape_cast %10 : vector<1x128x128xf32> to vector<128x128xf32>
    %cst_9 = arith.constant dense<0.000000e+00> : vector<8x128xf32>
    %12 = tpu.matmul %9, %11, %cst_9 {dimension_numbers = #tpu.dot_dimension_numbers<[1], [0], [0], [1], [0, 0, 1, 1], [], []>} : vector<8x128xf32>, vector<128x128xf32>, vector<8x128xf32> -> vector<8x128xf32>
    %13 = vector.extract_strided_slice %0 {offsets = [1, 0], sizes = [1, 128], strides = [1, 1]} : vector<8x128xf32> to vector<1x128xf32>
    %14 = vector.broadcast %13 : vector<1x128xf32> to vector<8x128xf32>
    %15 = arith.addf %12, %14 : vector<8x128xf32>
    %cst_10 = arith.constant 0.000000e+00 : f32
    %16 = vector.broadcast %cst_10 : f32 to vector<8x128xf32>
    %17 = arith.maximumf %15, %16 : vector<8x128xf32>
    %c2 = arith.constant 2 : index
    %c0_11 = arith.constant 0 : index
    %c0_12 = arith.constant 0 : index
    %18 = vector.load %arg2[%c2, %c0_11, %c0_12] : memref<5x128x128xf32, #tpu.memory_space<vmem>>, vector<1x128x128xf32>
    %19 = vector.shape_cast %18 : vector<1x128x128xf32> to vector<128x128xf32>
    %cst_13 = arith.constant dense<0.000000e+00> : vector<8x128xf32>
    %20 = tpu.matmul %17, %19, %cst_13 {dimension_numbers = #tpu.dot_dimension_numbers<[1], [0], [0], [1], [0, 0, 1, 1], [], []>} : vector<8x128xf32>, vector<128x128xf32>, vector<8x128xf32> -> vector<8x128xf32>
    %21 = vector.extract_strided_slice %0 {offsets = [2, 0], sizes = [1, 128], strides = [1, 1]} : vector<8x128xf32> to vector<1x128xf32>
    %22 = vector.broadcast %21 : vector<1x128xf32> to vector<8x128xf32>
    %23 = arith.addf %20, %22 : vector<8x128xf32>
    %cst_14 = arith.constant 0.000000e+00 : f32
    %24 = vector.broadcast %cst_14 : f32 to vector<8x128xf32>
    %25 = arith.maximumf %23, %24 : vector<8x128xf32>
    %c3 = arith.constant 3 : index
    %c0_15 = arith.constant 0 : index
    %c0_16 = arith.constant 0 : index
    %26 = vector.load %arg2[%c3, %c0_15, %c0_16] : memref<5x128x128xf32, #tpu.memory_space<vmem>>, vector<1x128x128xf32>
    %27 = vector.shape_cast %26 : vector<1x128x128xf32> to vector<128x128xf32>
    %cst_17 = arith.constant dense<0.000000e+00> : vector<8x128xf32>
    %28 = tpu.matmul %25, %27, %cst_17 {dimension_numbers = #tpu.dot_dimension_numbers<[1], [0], [0], [1], [0, 0, 1, 1], [], []>} : vector<8x128xf32>, vector<128x128xf32>, vector<8x128xf32> -> vector<8x128xf32>
    %29 = vector.extract_strided_slice %0 {offsets = [3, 0], sizes = [1, 128], strides = [1, 1]} : vector<8x128xf32> to vector<1x128xf32>
    %30 = vector.broadcast %29 : vector<1x128xf32> to vector<8x128xf32>
    %31 = arith.addf %28, %30 : vector<8x128xf32>
    %cst_18 = arith.constant 0.000000e+00 : f32
    %32 = vector.broadcast %cst_18 : f32 to vector<8x128xf32>
    %33 = arith.maximumf %31, %32 : vector<8x128xf32>
    %c4 = arith.constant 4 : index
    %c0_19 = arith.constant 0 : index
    %c0_20 = arith.constant 0 : index
    %34 = vector.load %arg2[%c4, %c0_19, %c0_20] : memref<5x128x128xf32, #tpu.memory_space<vmem>>, vector<1x128x128xf32>
    %35 = vector.shape_cast %34 : vector<1x128x128xf32> to vector<128x128xf32>
    %cst_21 = arith.constant dense<0.000000e+00> : vector<8x128xf32>
    %36 = tpu.matmul %33, %35, %cst_21 {dimension_numbers = #tpu.dot_dimension_numbers<[1], [0], [0], [1], [0, 0, 1, 1], [], []>} : vector<8x128xf32>, vector<128x128xf32>, vector<8x128xf32> -> vector<8x128xf32>
    %37 = vector.extract_strided_slice %0 {offsets = [4, 0], sizes = [1, 128], strides = [1, 1]} : vector<8x128xf32> to vector<1x128xf32>
    %38 = vector.broadcast %37 : vector<1x128xf32> to vector<8x128xf32>
    %39 = arith.addf %36, %38 : vector<8x128xf32>
    %40 = vector.extract_strided_slice %39 {offsets = [0, 0], sizes = [8, 32], strides = [1, 1]} : vector<8x128xf32> to vector<8x32xf32>
    %c0_22 = arith.constant 0 : index
    %c0_23 = arith.constant 0 : index
    %41 = vector.load %arg4[%c0_22, %c0_23] : memref<8x32xf32, #tpu.memory_space<vmem>>, vector<8x32xf32>
    tpu.vector_store %arg4[%c0_22, %c0_23], %40 {strides = array<i32>} : memref<8x32xf32, #tpu.memory_space<vmem>>, vector<8x32xf32>,
    return
  }
  func.func @transform_0(%arg0: i32) -> (i32, i32) {
    %c0_i32 = arith.constant 0 : i32
    %c0_i32_0 = arith.constant 0 : i32
    return %arg0, %c0_i32 : i32, i32
  }
  func.func @transform_1(%arg0: i32) -> (i32, i32, i32) {
    %c0_i32 = arith.constant 0 : i32
    %c0_i32_0 = arith.constant 0 : i32
    %c0_i32_1 = arith.constant 0 : i32
    %c0_i32_2 = arith.constant 0 : i32
    return %c0_i32, %c0_i32_0, %c0_i32_1 : i32, i32, i32
  }
  func.func @transform_2(%arg0: i32) -> (i32, i32) {
    %c0_i32 = arith.constant 0 : i32
    %c0_i32_0 = arith.constant 0 : i32
    %c0_i32_1 = arith.constant 0 : i32
    return %c0_i32, %c0_i32_0 : i32, i32
  }
  func.func @transform_3(%arg0: i32) -> (i32, i32) {
    %c0_i32 = arith.constant 0 : i32
    %c0_i32_0 = arith.constant 0 : i32
    return %arg0, %c0_i32 : i32, i32
  }
}

</mosaic_0001>

<llo_original>
// kernel: tpu_custom_call.1
$region0: #{tpu_custom_call.1}
  #allocation0 [shape = 'u32[]', space=smem, size = 0x4, offset = 0x4, fixed_abs, tag = 'smem constant byte address 0x4 - core index']
  #allocation1 [shape = 'u32[144,128]{1,0:T(1,128)}', space=vmem, size = 0x12000, scoped, tag = 'internal scratch']
  %s0 = inlined_call_operand.hbm [shape: f32[8,128], index: 0, kind: input, shape index: {}]
  %s1 = inlined_call_operand.hbm [shape: f32[5,128,128], index: 1, kind: input, shape index: {}]
  %s2 = inlined_call_operand.hbm [shape: f32[8,128], index: 2, kind: input, shape index: {}]
  %s3 = inlined_call_operand.hbm [shape: f32[8,32], index: 3, kind: output, shape index: {}]
  %s4 = sld [smem:[#allocation0]]
  $region34: #{tpu_custom_call.1} parent=0
    _
  %s6 = ssub.s32 1, %s4
  %s7 = scalar_select 0, %s6, %s4
  $region1: #{tpu_custom_call.1} parent=0
    #allocation2 [shape = 'u8[4096]{0}', space=vmem, size = 0x1000, scoped, tag = 'input window, operand 0, single buffered']
    #allocation3 [shape = 's32[1]{0}', space=sflag, size = 0x4, scoped, tag = 'scoped memory for tpu_custom_call.1']
    #allocation4 [shape = 's32[1]{0}', space=sflag, size = 0x4, scoped, tag = 'scoped memory for tpu_custom_call.1']
    #allocation5 [shape = 'u8[327680]{0}', space=vmem, size = 0x50000, scoped, tag = 'input window, operand 1, single buffered']
    #allocation6 [shape = 's32[1]{0}', space=sflag, size = 0x4, scoped, tag = 'scoped memory for tpu_custom_call.1']
    #allocation7 [shape = 'u8[4096]{0}', space=vmem, size = 0x1000, scoped, tag = 'input window, operand 2, single buffered']
    #allocation8 [shape = 'u8[4096]{0}', space=vmem, size = 0x1000, scoped, tag = 'output window, operand 0, single buffered']
    %8 = vsyncpa [#allocation3], 0
    %9 = vsyncpa [#allocation6], 0
    %10 = vsyncpa [#allocation4], 0
    // Predicated region
    $region2: #{tpu_custom_call.1} parent=1 // pred_check
      _
    $region3: #{tpu_custom_call.1} parent=1 // pred_check_branch
      %12 = sbr.rel (0) target = $region5
    $region4: #{tpu_custom_call.1} parent=1 // pred_region
      %s14 = ssub.s32 128, 128
      %15 = vsyncadd [#allocation3], %s14
      %s17 = sshll.u32 [#allocation2], 4
      %s18 = int_to_ptr.vmem [resolvable:$true] %s17
      %20 = dma.hbm_to_vmem [thread:$0]  %s0, 128, %s18, [#allocation3]
    $region5: #{tpu_custom_call.1} parent=1 // pred_fallthru
      _
    // Predicated region
    $region6: #{tpu_custom_call.1} parent=1 // pred_check
      _
    $region7: #{tpu_custom_call.1} parent=1 // pred_check_branch
      %22 = sbr.rel (0) target = $region9
    $region8: #{tpu_custom_call.1} parent=1 // pred_region
      %s24 = ssub.s32 10240, 10240
      %25 = vsyncadd [#allocation6], %s24
      %s26 = sshll.u32 [#allocation5], 4
      %s27 = int_to_ptr.vmem [resolvable:$true] %s26
      %32 = dma.hbm_to_vmem [thread:$0]  %s1, 10240, %s27, [#allocation6], 128, 128, 8
    $region9: #{tpu_custom_call.1} parent=1 // pred_fallthru
      _
    // Predicated region
    $region10: #{tpu_custom_call.1} parent=1 // pred_check
      _
    $region11: #{tpu_custom_call.1} parent=1 // pred_check_branch
      %34 = sbr.rel (0) target = $region13
    $region12: #{tpu_custom_call.1} parent=1 // pred_region
      %s36 = ssub.s32 128, 128
      %37 = vsyncadd [#allocation6], %s36
      %s39 = sshll.u32 [#allocation7], 4
      %s40 = int_to_ptr.vmem [resolvable:$true] %s39
      %42 = dma.hbm_to_vmem [thread:$0]  %s2, 128, %s40, [#allocation6]
    $region13: #{tpu_custom_call.1} parent=1 // pred_fallthru
      _
    // Predicated region
    $region14: #{tpu_custom_call.1} parent=1 // pred_check
      _
    $region15: #{tpu_custom_call.1} parent=1 // pred_check_branch
      %44 = sbr.rel (0) target = $region17
    $region16: #{tpu_custom_call.1} parent=1 // pred_region
      %45 = dma.done [#allocation3], 128
    $region17: #{tpu_custom_call.1} parent=1 // pred_fallthru
      _
    // Predicated region
    $region18: #{tpu_custom_call.1} parent=1 // pred_check
      _
    $region19: #{tpu_custom_call.1} parent=1 // pred_check_branch
      %47 = sbr.rel (0) target = $region21
    $region20: #{tpu_custom_call.1} parent=1 // pred_region
      %48 = dma.done [#allocation6], 10240
    $region21: #{tpu_custom_call.1} parent=1 // pred_fallthru
      _
    // Predicated region
    $region22: #{tpu_custom_call.1} parent=1 // pred_check
      _
    $region23: #{tpu_custom_call.1} parent=1 // pred_check_branch
      %50 = sbr.rel (0) target = $region25
    $region24: #{tpu_custom_call.1} parent=1 // pred_region
      %51 = dma.done [#allocation6], 128
    $region25: #{tpu_custom_call.1} parent=1 // pred_fallthru
      _
    %v52 = vld [vmem:[#allocation7] sm:$0xff]
    %v53 = vld [vmem:[#allocation2] sm:$0xff]
    %v54 = vld [vmem:[#allocation5] sm:$0xff]
    %v55 = vld [vmem:[#allocation5 + $0x8] sm:$0xff]
    %v56 = vld [vmem:[#allocation5 + $0x10] sm:$0xff]
    %v57 = vld [vmem:[#allocation5 + $0x18] sm:$0xff]
    %v58 = vld [vmem:[#allocation5 + $0x20] sm:$0xff]
    %v59 = vld [vmem:[#allocation5 + $0x28] sm:$0xff]
    %v60 = vld [vmem:[#allocation5 + $0x30] sm:$0xff]
    %v61 = vld [vmem:[#allocation5 + $0x38] sm:$0xff]
    %v62 = vld [vmem:[#allocation5 + $0x40] sm:$0xff]
    %v63 = vld [vmem:[#allocation5 + $0x48] sm:$0xff]
    %v64 = vld [vmem:[#allocation5 + $0x50] sm:$0xff]
    %v65 = vld [vmem:[#allocation5 + $0x58] sm:$0xff]
    %v66 = vld [vmem:[#allocation5 + $0x60] sm:$0xff]
    %v67 = vld [vmem:[#allocation5 + $0x68] sm:$0xff]
    %v68 = vld [vmem:[#allocation5 + $0x70] sm:$0xff]
    %v69 = vld [vmem:[#allocation5 + $0x78] sm:$0xff]
    %v70 = vlaneseq
    %v71 = vshrl.u32 %v70, 7
    %v72 = vsub.s32 0, %v71
    %v73 = vrot.slane %v52, %v72
    %74 = vmatprep.subr.mxu0 0.0
    %75 = vmatpush1.msra.mxu0 %v54
    %76 = vmatprep.subr.mxu0 0.0
    %77 = vmatpush1.msra.mxu0 %v55
    %78 = vmatprep.subr.mxu0 0.0
    %79 = vmatpush1.msra.mxu0 %v56
    %80 = vmatprep.subr.mxu0 0.0
    %81 = vmatpush1.msra.mxu0 %v57
    %82 = vmatprep.subr.mxu0 0.0
    %83 = vmatpush1.msra.mxu0 %v58
    %84 = vmatprep.subr.mxu0 0.0
    %85 = vmatpush1.msra.mxu0 %v59
    %86 = vmatprep.subr.mxu0 0.0
    %87 = vmatpush1.msra.mxu0 %v60
    %88 = vmatprep.subr.mxu0 0.0
    %89 = vmatpush1.msra.mxu0 %v61
    %90 = vmatprep.subr.mxu0 0.0
    %91 = vmatpush1.msra.mxu0 %v62
    %92 = vmatprep.subr.mxu0 0.0
    %93 = vmatpush1.msra.mxu0 %v63
    %94 = vmatprep.subr.mxu0 0.0
    %95 = vmatpush1.msra.mxu0 %v64
    %96 = vmatprep.subr.mxu0 0.0
    %97 = vmatpush1.msra.mxu0 %v65
    %98 = vmatprep.subr.mxu0 0.0
    %99 = vmatpush1.msra.mxu0 %v66
    %100 = vmatprep.subr.mxu0 0.0
    %101 = vmatpush1.msra.mxu0 %v67
    %102 = vmatprep.subr.mxu0 0.0
    %103 = vmatpush1.msra.mxu0 %v68
    %104 = vmatprep.subr.mxu0 0.0
    %105 = vmatpush1.msra.mxu0 %v69
    %106 = vmatprep.subr.mxu0 0.0
    %107 = vmatpush1.msra.mxu0 0.0
    %108 = vmatprep.subr.mxu0 0.0
    %109 = vmatpush1.msra.mxu0 0.0
    %110 = vmatprep.subr.mxu0 0.0
    %111 = vmatpush1.msra.mxu0 0.0
    %112 = vmatprep.subr.mxu0 0.0
    %113 = vmatpush1.msra.mxu0 0.0
    %114 = vmatprep.subr.mxu0 0.0
    %115 = vmatpush1.msra.mxu0 0.0
    %116 = vmatprep.subr.mxu0 0.0
    %117 = vmatpush1.msra.mxu0 0.0
    %118 = vmatprep.subr.mxu0 0.0
    %119 = vmatpush1.msra.mxu0 0.0
    %120 = vmatprep.subr.mxu0 0.0
    %121 = vmatpush1.msra.mxu0 0.0
    %122 = vmatprep.subr.mxu0 0.0
    %123 = vmatpush1.msra.mxu0 0.0
    %124 = vmatprep.subr.mxu0 0.0
    %125 = vmatpush1.msra.mxu0 0.0
    %126 = vmatprep.subr.mxu0 0.0
    %127 = vmatpush1.msra.mxu0 0.0
    %128 = vmatprep.subr.mxu0 0.0
    %129 = vmatpush1.msra.mxu0 0.0
    %130 = vmatprep.subr.mxu0 0.0
    %131 = vmatpush1.msra.mxu0 0.0
    %132 = vmatprep.subr.mxu0 0.0
    %133 = vmatpush1.msra.mxu0 0.0
    %134 = vmatprep.subr.mxu0 0.0
    %135 = vmatpush1.msra.mxu0 0.0
    %136 = vmatprep.subr.mxu0 0.0
    %137 = vmatpush1.msra.mxu0 0.0
    %138 = vmatprep.mubr.f32.mxu0 0.0
    %139 = vmatmul.mubr.f32.gmra.mrb[0].mxu0 %v53
    %v140 = vpop.f32.mrb[0].mxu0
    %v141 = vadd.f32 %v73, %v140
    %v142 = vpop.f32.mrb[0].mxu0
    %143 = vdwg.mxu0
    %v144 = vmax.f32 %v141, 0.0
    %s145 = scalar_lea.vmem [#allocation5], 128
    %v146 = vld [vmem:[%s145] sm:$0xff]
    %v147 = vld [vmem:[%s145 + $0x8] sm:$0xff]
    %v148 = vld [vmem:[%s145 + $0x10] sm:$0xff]
    %v149 = vld [vmem:[%s145 + $0x18] sm:$0xff]
    %v150 = vld [vmem:[%s145 + $0x20] sm:$0xff]
    %v151 = vld [vmem:[%s145 + $0x28] sm:$0xff]
    %v152 = vld [vmem:[%s145 + $0x30] sm:$0xff]
    %v153 = vld [vmem:[%s145 + $0x38] sm:$0xff]
    %v154 = vld [vmem:[%s145 + $0x40] sm:$0xff]
    %v155 = vld [vmem:[%s145 + $0x48] sm:$0xff]
    %v156 = vld [vmem:[%s145 + $0x50] sm:$0xff]
    %v157 = vld [vmem:[%s145 + $0x58] sm:$0xff]
    %v158 = vld [vmem:[%s145 + $0x60] sm:$0xff]
    %v159 = vld [vmem:[%s145 + $0x68] sm:$0xff]
    %v160 = vld [vmem:[%s145 + $0x70] sm:$0xff]
    %v161 = vld [vmem:[%s145 + $0x78] sm:$0xff]
    %v162 = vlaneseq
    %v163 = vshrl.u32 %v162, 7
    %v164 = vsub.s32 1, %v163
    %v165 = vrot.slane %v52, %v164
    %166 = vmatprep.subr.mxu0 0.0
    %167 = vmatpush1.msra.mxu0 %v146
    %168 = vmatprep.subr.mxu0 0.0
    %169 = vmatpush1.msra.mxu0 %v147
    %170 = vmatprep.subr.mxu0 0.0
    %171 = vmatpush1.msra.mxu0 %v148
    %172 = vmatprep.subr.mxu0 0.0
    %173 = vmatpush1.msra.mxu0 %v149
    %174 = vmatprep.subr.mxu0 0.0
    %175 = vmatpush1.msra.mxu0 %v150
    %176 = vmatprep.subr.mxu0 0.0
    %177 = vmatpush1.msra.mxu0 %v151
    %178 = vmatprep.subr.mxu0 0.0
    %179 = vmatpush1.msra.mxu0 %v152
    %180 = vmatprep.subr.mxu0 0.0
    %181 = vmatpush1.msra.mxu0 %v153
    %182 = vmatprep.subr.mxu0 0.0
    %183 = vmatpush1.msra.mxu0 %v154
    %184 = vmatprep.subr.mxu0 0.0
    %185 = vmatpush1.msra.mxu0 %v155
    %186 = vmatprep.subr.mxu0 0.0
    %187 = vmatpush1.msra.mxu0 %v156
    %188 = vmatprep.subr.mxu0 0.0
    %189 = vmatpush1.msra.mxu0 %v157
    %190 = vmatprep.subr.mxu0 0.0
    %191 = vmatpush1.msra.mxu0 %v158
    %192 = vmatprep.subr.mxu0 0.0
    %193 = vmatpush1.msra.mxu0 %v159
    %194 = vmatprep.subr.mxu0 0.0
    %195 = vmatpush1.msra.mxu0 %v160
    %196 = vmatprep.subr.mxu0 0.0
    %197 = vmatpush1.msra.mxu0 %v161
    %198 = vmatprep.subr.mxu0 0.0
    %199 = vmatpush1.msra.mxu0 0.0
    %200 = vmatprep.subr.mxu0 0.0
    %201 = vmatpush1.msra.mxu0 0.0
    %202 = vmatprep.subr.mxu0 0.0
    %203 = vmatpush1.msra.mxu0 0.0
    %204 = vmatprep.subr.mxu0 0.0
    %205 = vmatpush1.msra.mxu0 0.0
    %206 = vmatprep.subr.mxu0 0.0
    %207 = vmatpush1.msra.mxu0 0.0
    %208 = vmatprep.subr.mxu0 0.0
    %209 = vmatpush1.msra.mxu0 0.0
    %210 = vmatprep.subr.mxu0 0.0
    %211 = vmatpush1.msra.mxu0 0.0
    %212 = vmatprep.subr.mxu0 0.0
    %213 = vmatpush1.msra.mxu0 0.0
    %214 = vmatprep.subr.mxu0 0.0
    %215 = vmatpush1.msra.mxu0 0.0
    %216 = vmatprep.subr.mxu0 0.0
    %217 = vmatpush1.msra.mxu0 0.0
    %218 = vmatprep.subr.mxu0 0.0
    %219 = vmatpush1.msra.mxu0 0.0
    %220 = vmatprep.subr.mxu0 0.0
    %221 = vmatpush1.msra.mxu0 0.0
    %222 = vmatprep.subr.mxu0 0.0
    %223 = vmatpush1.msra.mxu0 0.0
    %224 = vmatprep.subr.mxu0 0.0
    %225 = vmatpush1.msra.mxu0 0.0
    %226 = vmatprep.subr.mxu0 0.0
    %227 = vmatpush1.msra.mxu0 0.0
    %228 = vmatprep.subr.mxu0 0.0
    %229 = vmatpush1.msra.mxu0 0.0
    %230 = vmatprep.mubr.f32.mxu0 0.0
    %231 = vmatmul.mubr.f32.gmra.mrb[0].mxu0 %v144
    %v232 = vpop.f32.mrb[0].mxu0
    %v233 = vadd.f32 %v165, %v232
    %v234 = vpop.f32.mrb[0].mxu0
    %235 = vdwg.mxu0
    %v236 = vmax.f32 %v233, 0.0
    %s237 = scalar_lea.vmem [#allocation5], 256
    %v238 = vld [vmem:[%s237] sm:$0xff]
    %v239 = vld [vmem:[%s237 + $0x8] sm:$0xff]
    %v240 = vld [vmem:[%s237 + $0x10] sm:$0xff]
    %v241 = vld [vmem:[%s237 + $0x18] sm:$0xff]
    %v242 = vld [vmem:[%s237 + $0x20] sm:$0xff]
    %v243 = vld [vmem:[%s237 + $0x28] sm:$0xff]
    %v244 = vld [vmem:[%s237 + $0x30] sm:$0xff]
    %v245 = vld [vmem:[%s237 + $0x38] sm:$0xff]
    %v246 = vld [vmem:[%s237 + $0x40] sm:$0xff]
    %v247 = vld [vmem:[%s237 + $0x48] sm:$0xff]
    %v248 = vld [vmem:[%s237 + $0x50] sm:$0xff]
    %v249 = vld [vmem:[%s237 + $0x58] sm:$0xff]
    %v250 = vld [vmem:[%s237 + $0x60] sm:$0xff]
    %v251 = vld [vmem:[%s237 + $0x68] sm:$0xff]
    %v252 = vld [vmem:[%s237 + $0x70] sm:$0xff]
    %v253 = vld [vmem:[%s237 + $0x78] sm:$0xff]
    %v254 = vlaneseq
    %v255 = vshrl.u32 %v254, 7
    %v256 = vsub.s32 2, %v255
    %v257 = vrot.slane %v52, %v256
    %258 = vmatprep.subr.mxu0 0.0
    %259 = vmatpush1.msra.mxu0 %v238
    %260 = vmatprep.subr.mxu0 0.0
    %261 = vmatpush1.msra.mxu0 %v239
    %262 = vmatprep.subr.mxu0 0.0
    %263 = vmatpush1.msra.mxu0 %v240
    %264 = vmatprep.subr.mxu0 0.0
    %265 = vmatpush1.msra.mxu0 %v241
    %266 = vmatprep.subr.mxu0 0.0
    %267 = vmatpush1.msra.mxu0 %v242
    %268 = vmatprep.subr.mxu0 0.0
    %269 = vmatpush1.msra.mxu0 %v243
    %270 = vmatprep.subr.mxu0 0.0
    %271 = vmatpush1.msra.mxu0 %v244
    %272 = vmatprep.subr.mxu0 0.0
    %273 = vmatpush1.msra.mxu0 %v245
    %274 = vmatprep.subr.mxu0 0.0
    %275 = vmatpush1.msra.mxu0 %v246
    %276 = vmatprep.subr.mxu0 0.0
    %277 = vmatpush1.msra.mxu0 %v247
    %278 = vmatprep.subr.mxu0 0.0
    %279 = vmatpush1.msra.mxu0 %v248
    %280 = vmatprep.subr.mxu0 0.0
    %281 = vmatpush1.msra.mxu0 %v249
    %282 = vmatprep.subr.mxu0 0.0
    %283 = vmatpush1.msra.mxu0 %v250
    %284 = vmatprep.subr.mxu0 0.0
    %285 = vmatpush1.msra.mxu0 %v251
    %286 = vmatprep.subr.mxu0 0.0
    %287 = vmatpush1.msra.mxu0 %v252
    %288 = vmatprep.subr.mxu0 0.0
    %289 = vmatpush1.msra.mxu0 %v253
    %290 = vmatprep.subr.mxu0 0.0
    %291 = vmatpush1.msra.mxu0 0.0
    %292 = vmatprep.subr.mxu0 0.0
    %293 = vmatpush1.msra.mxu0 0.0
    %294 = vmatprep.subr.mxu0 0.0
    %295 = vmatpush1.msra.mxu0 0.0
    %296 = vmatprep.subr.mxu0 0.0
    %297 = vmatpush1.msra.mxu0 0.0
    %298 = vmatprep.subr.mxu0 0.0
    %299 = vmatpush1.msra.mxu0 0.0
    %300 = vmatprep.subr.mxu0 0.0
    %301 = vmatpush1.msra.mxu0 0.0
    %302 = vmatprep.subr.mxu0 0.0
    %303 = vmatpush1.msra.mxu0 0.0
    %304 = vmatprep.subr.mxu0 0.0
    %305 = vmatpush1.msra.mxu0 0.0
    %306 = vmatprep.subr.mxu0 0.0
    %307 = vmatpush1.msra.mxu0 0.0
    %308 = vmatprep.subr.mxu0 0.0
    %309 = vmatpush1.msra.mxu0 0.0
    %310 = vmatprep.subr.mxu0 0.0
    %311 = vmatpush1.msra.mxu0 0.0
    %312 = vmatprep.subr.mxu0 0.0
    %313 = vmatpush1.msra.mxu0 0.0
    %314 = vmatprep.subr.mxu0 0.0
    %315 = vmatpush1.msra.mxu0 0.0
    %316 = vmatprep.subr.mxu0 0.0
    %317 = vmatpush1.msra.mxu0 0.0
    %318 = vmatprep.subr.mxu0 0.0
    %319 = vmatpush1.msra.mxu0 0.0
    %320 = vmatprep.subr.mxu0 0.0
    %321 = vmatpush1.msra.mxu0 0.0
    %322 = vmatprep.mubr.f32.mxu0 0.0
    %323 = vmatmul.mubr.f32.gmra.mrb[0].mxu0 %v236
    %v324 = vpop.f32.mrb[0].mxu0
    %v325 = vadd.f32 %v257, %v324
    %v326 = vpop.f32.mrb[0].mxu0
    %327 = vdwg.mxu0
    %v328 = vmax.f32 %v325, 0.0
    %s329 = scalar_lea.vmem [#allocation5], 384
    %v330 = vld [vmem:[%s329] sm:$0xff]
    %v331 = vld [vmem:[%s329 + $0x8] sm:$0xff]
    %v332 = vld [vmem:[%s329 + $0x10] sm:$0xff]
    %v333 = vld [vmem:[%s329 + $0x18] sm:$0xff]
    %v334 = vld [vmem:[%s329 + $0x20] sm:$0xff]
    %v335 = vld [vmem:[%s329 + $0x28] sm:$0xff]
    %v336 = vld [vmem:[%s329 + $0x30] sm:$0xff]
    %v337 = vld [vmem:[%s329 + $0x38] sm:$0xff]
    %v338 = vld [vmem:[%s329 + $0x40] sm:$0xff]
    %v339 = vld [vmem:[%s329 + $0x48] sm:$0xff]
    %v340 = vld [vmem:[%s329 + $0x50] sm:$0xff]
    %v341 = vld [vmem:[%s329 + $0x58] sm:$0xff]
    %v342 = vld [vmem:[%s329 + $0x60] sm:$0xff]
    %v343 = vld [vmem:[%s329 + $0x68] sm:$0xff]
    %v344 = vld [vmem:[%s329 + $0x70] sm:$0xff]
    %v345 = vld [vmem:[%s329 + $0x78] sm:$0xff]
    %v346 = vlaneseq
    %v347 = vshrl.u32 %v346, 7
    %v348 = vsub.s32 3, %v347
    %v349 = vrot.slane %v52, %v348
    %350 = vmatprep.subr.mxu0 0.0
    %351 = vmatpush1.msra.mxu0 %v330
    %352 = vmatprep.subr.mxu0 0.0
    %353 = vmatpush1.msra.mxu0 %v331
    %354 = vmatprep.subr.mxu0 0.0
    %355 = vmatpush1.msra.mxu0 %v332
    %356 = vmatprep.subr.mxu0 0.0
    %357 = vmatpush1.msra.mxu0 %v333
    %358 = vmatprep.subr.mxu0 0.0
    %359 = vmatpush1.msra.mxu0 %v334
    %360 = vmatprep.subr.mxu0 0.0
    %361 = vmatpush1.msra.mxu0 %v335
    %362 = vmatprep.subr.mxu0 0.0
    %363 = vmatpush1.msra.mxu0 %v336
    %364 = vmatprep.subr.mxu0 0.0
    %365 = vmatpush1.msra.mxu0 %v337
    %366 = vmatprep.subr.mxu0 0.0
    %367 = vmatpush1.msra.mxu0 %v338
    %368 = vmatprep.subr.mxu0 0.0
    %369 = vmatpush1.msra.mxu0 %v339
    %370 = vmatprep.subr.mxu0 0.0
    %371 = vmatpush1.msra.mxu0 %v340
    %372 = vmatprep.subr.mxu0 0.0
    %373 = vmatpush1.msra.mxu0 %v341
    %374 = vmatprep.subr.mxu0 0.0
    %375 = vmatpush1.msra.mxu0 %v342
    %376 = vmatprep.subr.mxu0 0.0
    %377 = vmatpush1.msra.mxu0 %v343
    %378 = vmatprep.subr.mxu0 0.0
    %379 = vmatpush1.msra.mxu0 %v344
    %380 = vmatprep.subr.mxu0 0.0
    %381 = vmatpush1.msra.mxu0 %v345
    %382 = vmatprep.subr.mxu0 0.0
    %383 = vmatpush1.msra.mxu0 0.0
    %384 = vmatprep.subr.mxu0 0.0
    %385 = vmatpush1.msra.mxu0 0.0
    %386 = vmatprep.subr.mxu0 0.0
    %387 = vmatpush1.msra.mxu0 0.0
    %388 = vmatprep.subr.mxu0 0.0
    %389 = vmatpush1.msra.mxu0 0.0
    %390 = vmatprep.subr.mxu0 0.0
    %391 = vmatpush1.msra.mxu0 0.0
    %392 = vmatprep.subr.mxu0 0.0
    %393 = vmatpush1.msra.mxu0 0.0
    %394 = vmatprep.subr.mxu0 0.0
    %395 = vmatpush1.msra.mxu0 0.0
    %396 = vmatprep.subr.mxu0 0.0
    %397 = vmatpush1.msra.mxu0 0.0
    %398 = vmatprep.subr.mxu0 0.0
    %399 = vmatpush1.msra.mxu0 0.0
    %400 = vmatprep.subr.mxu0 0.0
    %401 = vmatpush1.msra.mxu0 0.0
    %402 = vmatprep.subr.mxu0 0.0
    %403 = vmatpush1.msra.mxu0 0.0
    %404 = vmatprep.subr.mxu0 0.0
    %405 = vmatpush1.msra.mxu0 0.0
    %406 = vmatprep.subr.mxu0 0.0
    %407 = vmatpush1.msra.mxu0 0.0
    %408 = vmatprep.subr.mxu0 0.0
    %409 = vmatpush1.msra.mxu0 0.0
    %410 = vmatprep.subr.mxu0 0.0
    %411 = vmatpush1.msra.mxu0 0.0
    %412 = vmatprep.subr.mxu0 0.0
    %413 = vmatpush1.msra.mxu0 0.0
    %414 = vmatprep.mubr.f32.mxu0 0.0
    %415 = vmatmul.mubr.f32.gmra.mrb[0].mxu0 %v328
    %v416 = vpop.f32.mrb[0].mxu0
    %v417 = vadd.f32 %v349, %v416
    %v418 = vpop.f32.mrb[0].mxu0
    %419 = vdwg.mxu0
    %v420 = vmax.f32 %v417, 0.0
    %s421 = scalar_lea.vmem [#allocation5], 512
    %v422 = vld [vmem:[%s421] sm:$0xff]
    %v423 = vld [vmem:[%s421 + $0x8] sm:$0xff]
    %v424 = vld [vmem:[%s421 + $0x10] sm:$0xff]
    %v425 = vld [vmem:[%s421 + $0x18] sm:$0xff]
    %v426 = vld [vmem:[%s421 + $0x20] sm:$0xff]
    %v427 = vld [vmem:[%s421 + $0x28] sm:$0xff]
    %v428 = vld [vmem:[%s421 + $0x30] sm:$0xff]
    %v429 = vld [vmem:[%s421 + $0x38] sm:$0xff]
    %v430 = vld [vmem:[%s421 + $0x40] sm:$0xff]
    %v431 = vld [vmem:[%s421 + $0x48] sm:$0xff]
    %v432 = vld [vmem:[%s421 + $0x50] sm:$0xff]
    %v433 = vld [vmem:[%s421 + $0x58] sm:$0xff]
    %v434 = vld [vmem:[%s421 + $0x60] sm:$0xff]
    %v435 = vld [vmem:[%s421 + $0x68] sm:$0xff]
    %v436 = vld [vmem:[%s421 + $0x70] sm:$0xff]
    %v437 = vld [vmem:[%s421 + $0x78] sm:$0xff]
    %v438 = vlaneseq
    %v439 = vshrl.u32 %v438, 7
    %v440 = vsub.s32 4, %v439
    %v441 = vrot.slane %v52, %v440
    %442 = vmatprep.subr.mxu0 0.0
    %443 = vmatpush1.msra.mxu0 %v422
    %444 = vmatprep.subr.mxu0 0.0
    %445 = vmatpush1.msra.mxu0 %v423
    %446 = vmatprep.subr.mxu0 0.0
    %447 = vmatpush1.msra.mxu0 %v424
    %448 = vmatprep.subr.mxu0 0.0
    %449 = vmatpush1.msra.mxu0 %v425
    %450 = vmatprep.subr.mxu0 0.0
    %451 = vmatpush1.msra.mxu0 %v426
    %452 = vmatprep.subr.mxu0 0.0
    %453 = vmatpush1.msra.mxu0 %v427
    %454 = vmatprep.subr.mxu0 0.0
    %455 = vmatpush1.msra.mxu0 %v428
    %456 = vmatprep.subr.mxu0 0.0
    %457 = vmatpush1.msra.mxu0 %v429
    %458 = vmatprep.subr.mxu0 0.0
    %459 = vmatpush1.msra.mxu0 %v430
    %460 = vmatprep.subr.mxu0 0.0
    %461 = vmatpush1.msra.mxu0 %v431
    %462 = vmatprep.subr.mxu0 0.0
    %463 = vmatpush1.msra.mxu0 %v432
    %464 = vmatprep.subr.mxu0 0.0
    %465 = vmatpush1.msra.mxu0 %v433
    %466 = vmatprep.subr.mxu0 0.0
    %467 = vmatpush1.msra.mxu0 %v434
    %468 = vmatprep.subr.mxu0 0.0
    %469 = vmatpush1.msra.mxu0 %v435
    %470 = vmatprep.subr.mxu0 0.0
    %471 = vmatpush1.msra.mxu0 %v436
    %472 = vmatprep.subr.mxu0 0.0
    %473 = vmatpush1.msra.mxu0 %v437
    %474 = vmatprep.subr.mxu0 0.0
    %475 = vmatpush1.msra.mxu0 0.0
    %476 = vmatprep.subr.mxu0 0.0
    %477 = vmatpush1.msra.mxu0 0.0
    %478 = vmatprep.subr.mxu0 0.0
    %479 = vmatpush1.msra.mxu0 0.0
    %480 = vmatprep.subr.mxu0 0.0
    %481 = vmatpush1.msra.mxu0 0.0
    %482 = vmatprep.subr.mxu0 0.0
    %483 = vmatpush1.msra.mxu0 0.0
    %484 = vmatprep.subr.mxu0 0.0
    %485 = vmatpush1.msra.mxu0 0.0
    %486 = vmatprep.subr.mxu0 0.0
    %487 = vmatpush1.msra.mxu0 0.0
    %488 = vmatprep.subr.mxu0 0.0
    %489 = vmatpush1.msra.mxu0 0.0
    %490 = vmatprep.subr.mxu0 0.0
    %491 = vmatpush1.msra.mxu0 0.0
    %492 = vmatprep.subr.mxu0 0.0
    %493 = vmatpush1.msra.mxu0 0.0
    %494 = vmatprep.subr.mxu0 0.0
    %495 = vmatpush1.msra.mxu0 0.0
    %496 = vmatprep.subr.mxu0 0.0
    %497 = vmatpush1.msra.mxu0 0.0
    %498 = vmatprep.subr.mxu0 0.0
    %499 = vmatpush1.msra.mxu0 0.0
    %500 = vmatprep.subr.mxu0 0.0
    %501 = vmatpush1.msra.mxu0 0.0
    %502 = vmatprep.subr.mxu0 0.0
    %503 = vmatpush1.msra.mxu0 0.0
    %504 = vmatprep.subr.mxu0 0.0
    %505 = vmatpush1.msra.mxu0 0.0
    %506 = vmatprep.mubr.f32.mxu0 0.0
    %507 = vmatmul.mubr.f32.gmra.mrb[0].mxu0 %v420
    %v508 = vpop.f32.mrb[0].mxu0
    %v509 = vadd.f32 %v441, %v508
    %v510 = vpop.f32.mrb[0].mxu0
    %511 = vdwg.mxu0
    %vm512 = vcmask 261120
    %513 = vst.msk [vmem:[#allocation8] sm:$0xff] %vm512, %v509
    // Predicated region
    $region26: #{tpu_custom_call.1} parent=1 // pred_check
      _
    $region27: #{tpu_custom_call.1} parent=1 // pred_check_branch
      %515 = sbr.rel (0) target = $region29
    $region28: #{tpu_custom_call.1} parent=1 // pred_region
      %s517 = ssub.s32 128, 128
      %518 = vsyncadd [#allocation4], %s517
      %s520 = sshll.u32 [#allocation8], 4
      %s521 = int_to_ptr.vmem [resolvable:$true] %s520
      %523 = dma.vmem_to_hbm [thread:$0]  %s521, 128, %s3, [#allocation4]
    $region29: #{tpu_custom_call.1} parent=1 // pred_fallthru
      _
    // Predicated region
    $region30: #{tpu_custom_call.1} parent=1 // pred_check
      _
    $region31: #{tpu_custom_call.1} parent=1 // pred_check_branch
      %525 = sbr.rel (0) target = $region33
    $region32: #{tpu_custom_call.1} parent=1 // pred_region
      %526 = dma.done [#allocation4], 128
    $region33: #{tpu_custom_call.1} parent=1 // pred_fallthru
      _
    %527 = vsyncpa [#allocation3], 1
    %528 = vsyncpa [#allocation6], 1
    %529 = vsyncpa [#allocation4], 1

</llo_original>
